<compile_context>
chip_gen: v7x
topology: tpu7x:2x2x1
jax: 0.10.0
libtpu: 0.0.40
codegen_flags: <defaults>
</compile_context>

<pallas_src>
import functools
import math

import jax
import jax.numpy as jnp
from jax.experimental import pallas as pl
from jax.experimental.pallas import tpu as pltpu


def _round_up(x: int, m: int) -> int:
    return ((x + m - 1) // m) * m


def _pick_tile(dim_padded: int, cap: int, quantum: int) -> int:
    """Largest multiple of `quantum` <= cap that divides dim_padded.
    dim_padded is a multiple of `quantum` by construction (prepare_params)."""
    if dim_padded <= cap:
        return dim_padded
    t = (cap // quantum) * quantum
    while t > quantum and dim_padded % t != 0:
        t -= quantum
    return max(t, quantum)


# ----------------------------------------------------------------------------
# Kernels
# ----------------------------------------------------------------------------
def _lehmer_kernel(x_ref, wt_ref, b_ref, o_ref):
    """Tiled matmul with fused bias epilogue.

    grid = (Mp//tm, Np//tn, Kp//tk); K is the last ("arbitrary") axis.  The
    output block index is K-invariant, so o_ref stays resident in VMEM across
    the K axis and is used directly as the f32 accumulator.  (Correctness
    depends on K being last + arbitrary — do not reorder the grid.)
    """
    k = pl.program_id(2)

    @pl.when(k == 0)
    def _():
        o_ref[...] = jnp.zeros_like(o_ref)

    # Hot path: bf16 x bf16 -> f32 MXU accumulation.
    o_ref[...] += jnp.dot(
        x_ref[...], wt_ref[...], preferred_element_type=jnp.float32
    )

    @pl.when(k == pl.num_programs(2) - 1)
    def _():
        # Collapsed Generalized-Lehmer epilogue: only the bias add remains.
        o_ref[...] = o_ref[...] + b_ref[...]


def _lehmer_single_kernel(x_ref, wt_ref, b_ref, o_ref):
    """Whole problem in one block: no K axis, no accumulator state."""
    o_ref[...] = (
        jnp.dot(x_ref[...], wt_ref[...], preferred_element_type=jnp.float32)
        + b_ref[...]
    )


# ----------------------------------------------------------------------------
# One-time parameter preparation (do at init, NOT per forward)
# ----------------------------------------------------------------------------
def prepare_params(weight, bias=None):
    """Transpose the PyTorch-layout weight [out,in] -> W^T [in,out], cast it to
    bf16 for the MXU, and zero-pad K/N once so the per-call forward never pads
    the weight.  K/N > 128 are padded to multiples of 256 so tiles can stay
    256-aligned for the v6e/v7x MXU.  Bias stays f32 (epilogue add is f32).

    Returns (wt_bf16 [Kp, Np], bias2d_f32 [1, Np], n_out).
    """
    wt = jnp.asarray(weight, jnp.float32).T          # [K, N], lane-dense N last
    K, N = wt.shape
    if bias is None:
        bias = jnp.zeros((N,), jnp.float32)
    bias2d = jnp.asarray(bias, jnp.float32).reshape(1, -1)

    Kp = 128 if K <= 128 else _round_up(K, 256)
    Np = 128 if N <= 128 else _round_up(N, 256)
    if (Kp, Np) != (K, N):
        wt = jnp.pad(wt, ((0, Kp - K), (0, Np - N)))
    if Np != N:
        bias2d = jnp.pad(bias2d, ((0, 0), (0, Np - N)))
    return wt.astype(jnp.bfloat16), bias2d, N


# ----------------------------------------------------------------------------
# Forward
# ----------------------------------------------------------------------------
@functools.partial(
    jax.jit, static_argnames=("n_out", "tm_cap", "tn_cap", "tk_cap")
)
def generalized_lehmer_layer(x, wt, bias2d, alpha=None, beta=None, *,
                             n_out, tm_cap=512, tn_cap=512, tk_cap=4096):
    """x: [M, in_features]; wt/bias2d: from prepare_params; n_out: true
    out_features (static).  alpha/beta accepted for API parity but cancel
    algebraically (precondition: alpha > 0, alpha != 1, as in the module)."""
    del alpha, beta  # cancel exactly: a*b == m

    M, K = x.shape
    Kp, Np = wt.shape
    assert K <= Kp, "x in_features exceeds the prepared weight's in_features"
    N = n_out

    x = x.astype(jnp.bfloat16)

    # ---- tile selection ---------------------------------------------------
    tm = min(tm_cap, _round_up(M, 8))
    Mp = _round_up(M, tm)
    tn = _pick_tile(Np, tn_cap, 256 if Np > 128 else 128)
    tk = _pick_tile(Kp, tk_cap, 256 if Kp > 128 else 128)

    single_block = (Mp == tm) and (Np == tn) and (Kp == tk)

    if not single_block and (Mp // tm) * (Np // tn) < 2:
        # Megacore occupancy: make sure the parallel grid has >= 2 tiles so
        # both v7x TensorCores get work (harmless elsewhere: one extra step).
        if tn >= 256 and tn % 256 == 0:
            tn //= 2
        elif tm >= 16 and tm % 16 == 0:
            tm //= 2

    # ---- pad only x per call (weight/bias already padded at init) ---------
    if (Mp, Kp) != (M, K):
        x = jnp.pad(x, ((0, Mp - M), (0, Kp - K)))

    # ---- VMEM budget: double-buffered bf16 tiles + resident f32 output ----
    ws = 2 * 2 * (tm * tk) + 2 * 2 * (tk * tn) + 2 * 4 * (8 * tn) + 2 * 4 * (tm * tn)
    try:
        vmem_cap = int(pltpu.get_tpu_info().vmem_capacity_bytes)
    except Exception:  # pragma: no cover - conservative fallback (v7x per-TC)
        vmem_cap = 64 << 20
    vmem_limit = max(16 << 20, min(ws + ws // 2 + (2 << 20), vmem_cap * 6 // 10))

    cost = pl.CostEstimate(
        flops=2 * Mp * Kp * Np,
        transcendentals=0,
        bytes_accessed=Mp * Kp * 2 + Kp * Np * 2 + Np * 4 + Mp * Np * 4,
    )

    if single_block:
        out = pl.pallas_call(
            _lehmer_single_kernel,
            out_shape=jax.ShapeDtypeStruct((Mp, Np), jnp.float32),
            grid_spec=pltpu.PrefetchScalarGridSpec(
                num_scalar_prefetch=0,
                grid=(1,),
                in_specs=[
                    pl.BlockSpec((Mp, Kp), lambda i: (0, 0)),
                    pl.BlockSpec((Kp, Np), lambda i: (0, 0)),
                    pl.BlockSpec((1, Np), lambda i: (0, 0)),
                ],
                out_specs=pl.BlockSpec((Mp, Np), lambda i: (0, 0)),
            ),
            compiler_params=pltpu.CompilerParams(
                dimension_semantics=("arbitrary",),
                vmem_limit_bytes=vmem_limit,
            ),
            cost_estimate=cost,
        )(x, wt, bias2d)
    else:
        grid = (Mp // tm, Np // tn, Kp // tk)
        out = pl.pallas_call(
            _lehmer_kernel,
            out_shape=jax.ShapeDtypeStruct((Mp, Np), jnp.float32),
            grid_spec=pltpu.PrefetchScalarGridSpec(
                num_scalar_prefetch=0,
                grid=grid,
                in_specs=[
                    pl.BlockSpec((tm, tk), lambda i, j, k: (i, k)),
                    pl.BlockSpec((tk, tn), lambda i, j, k: (k, j)),
                    pl.BlockSpec((1, tn), lambda i, j, k: (0, j)),
                ],
                out_specs=pl.BlockSpec((tm, tn), lambda i, j, k: (i, j)),
            ),
            compiler_params=pltpu.CompilerParams(
                dimension_semantics=("parallel", "parallel", "arbitrary"),
                vmem_limit_bytes=vmem_limit,
            ),
            cost_estimate=cost,
        )(x, wt, bias2d)

    if (Mp, Np) != (M, N):
        out = out[:M, :N]
    return out


# ----------------------------------------------------------------------------
# Reference + self-test
# ----------------------------------------------------------------------------
def _reference(x, weight, bias, alpha, beta):
    # Literal PyTorch formulation (pow/log path) for verification, in f32.
    m = x @ weight.T
    a = 1.0 / jnp.log(alpha)
    b = jnp.log(jnp.power(alpha, (beta + 1.0) * m) / jnp.power(alpha, beta * m))
    return a * b + bias


def _make_inputs(key, batch, in_features, out_features):
    k_x, k_w, k_b = jax.random.split(key, 3)
    # Mirror the PyTorch init: kaiming_uniform_(a=sqrt(5)) -> U(+-1/sqrt(fan_in)).
    bound = 1.0 / math.sqrt(in_features)
    weight = jax.random.uniform(
        k_w, (out_features, in_features), jnp.float32, minval=-bound, maxval=bound
    )
    bias = jax.random.uniform(
        k_b, (out_features,), jnp.float32, minval=-bound, maxval=bound
    )
    x = jax.random.normal(k_x, (batch, in_features), jnp.float32)
    return x, weight, bias


if __name__ == "__main__":
    alpha, beta = 1.8, 1.3
    key = jax.random.PRNGKey(0)
    k1, k2, k3 = jax.random.split(key, 3)

    # Case 1: the module's small shape (single-block bypass, N=32 lane padding).
    x, weight, bias = _make_inputs(k1, batch=8, in_features=64, out_features=32)
    wt, bias2d, n_out = prepare_params(weight, bias)     # pad + cast ONCE, at init
    out = generalized_lehmer_layer(x, wt, bias2d, alpha, beta, n_out=n_out)
    out = jax.block_until_ready(out)
    ref = _reference(x, weight, bias, jnp.float32(alpha), jnp.float32(beta))
    assert out.shape == (8, 32)
    # bf16 operands -> ~1e-2-level relative error is expected (intended change).
    assert jnp.allclose(out, ref, atol=3e-2, rtol=3e-2), "case1 mismatch vs reference"

    # Case 2: non-divisible shapes (M/K/N padding, still single-block).
    x2, w2, b2 = _make_inputs(k2, batch=96, in_features=200, out_features=176)
    wt2, b2d2, n2 = prepare_params(w2, b2)
    out2 = generalized_lehmer_layer(x2, wt2, b2d2, alpha, beta, n_out=n2)
    out2 = jax.block_until_ready(out2)
    ref2 = _reference(x2, w2, b2, jnp.float32(alpha), jnp.float32(beta))
    assert out2.shape == (96, 176)
    assert jnp.allclose(out2, ref2, atol=3e-2, rtol=3e-2), "case2 mismatch vs reference"

    # Case 3: large K -> exercises the tiled K-accumulation path and the
    # megacore occupancy heuristic.  Compared against an XLA bf16 matmul so the
    # tolerance isolates kernel correctness from the bf16 precision choice.
    x3, w3, b3 = _make_inputs(k3, batch=64, in_features=8448, out_features=256)
    wt3, b3d3, n3 = prepare_params(w3, b3)
    out3 = generalized_lehmer_layer(x3, wt3, b3d3, alpha, beta, n_out=n3)
    out3 = jax.block_until_ready(out3)
    ref3 = jnp.dot(x3.astype(jnp.bfloat16), w3.T.astype(jnp.bfloat16),
                   preferred_element_type=jnp.float32) + b3
    assert out3.shape == (64, 256)
    assert jnp.allclose(out3, ref3, atol=1e-2, rtol=1e-2), "case3 mismatch vs bf16 matmul"

    print("KERNEL_OK")
</pallas_src>

<mosaic_0001>
module attributes {stable_mosaic.version = 11 : i64} {
  func.func @_lehmer_single_kernel(%arg0: i32, %arg1: memref<8x128xbf16, #tpu.memory_space<vmem>>, %arg2: memref<128x128xbf16, #tpu.memory_space<vmem>>, %arg3: memref<1x128xf32, #tpu.memory_space<vmem>>, %arg4: memref<8x128xf32, #tpu.memory_space<vmem>>) attributes {dimension_semantics = [#tpu.dimension_semantics<arbitrary>], iteration_bounds = array<i64: 1>, scalar_prefetch = 0 : i64, scratch_operands = 0 : i64, tpu.core_type = #tpu.core_type<tc>, window_params = [{pipeline_mode = #tpu.pipeline_mode<synchronous>, transform_indices = @transform_0, window_bounds = array<i64: 8, 128>}, {pipeline_mode = #tpu.pipeline_mode<synchronous>, transform_indices = @transform_1, window_bounds = array<i64: 128, 128>}, {pipeline_mode = #tpu.pipeline_mode<synchronous>, transform_indices = @transform_2, window_bounds = array<i64: 1, 128>}, {pipeline_mode = #tpu.pipeline_mode<synchronous>, transform_indices = @transform_3, window_bounds = array<i64: 8, 128>}]} {
    %c0 = arith.constant 0 : index
    %c0_0 = arith.constant 0 : index
    %0 = vector.load %arg1[%c0, %c0_0] : memref<8x128xbf16, #tpu.memory_space<vmem>>, vector<8x128xbf16>
    %c0_1 = arith.constant 0 : index
    %c0_2 = arith.constant 0 : index
    %1 = vector.load %arg2[%c0_1, %c0_2] : memref<128x128xbf16, #tpu.memory_space<vmem>>, vector<128x128xbf16>
    %cst = arith.constant dense<0.000000e+00> : vector<8x128xf32>
    %2 = tpu.matmul %0, %1, %cst {dimension_numbers = #tpu.dot_dimension_numbers<[1], [0], [0], [1], [0, 0, 1, 1], [], []>} : vector<8x128xbf16>, vector<128x128xbf16>, vector<8x128xf32> -> vector<8x128xf32>
    %c0_3 = arith.constant 0 : index
    %c0_4 = arith.constant 0 : index
    %3 = vector.load %arg3[%c0_3, %c0_4] : memref<1x128xf32, #tpu.memory_space<vmem>>, vector<1x128xf32>
    %4 = vector.broadcast %3 : vector<1x128xf32> to vector<8x128xf32>
    %5 = arith.addf %2, %4 : vector<8x128xf32>
    %c0_5 = arith.constant 0 : index
    %c0_6 = arith.constant 0 : index
    %6 = vector.load %arg4[%c0_5, %c0_6] : memref<8x128xf32, #tpu.memory_space<vmem>>, vector<8x128xf32>
    tpu.vector_store %arg4[%c0_5, %c0_6], %5 {strides = array<i32>} : memref<8x128xf32, #tpu.memory_space<vmem>>, vector<8x128xf32>,
    return
  }
  func.func @transform_0(%arg0: i32) -> (i32, i32) {
    %c0_i32 = arith.constant 0 : i32
    %c0_i32_0 = arith.constant 0 : i32
    %c0_i32_1 = arith.constant 0 : i32
    return %c0_i32, %c0_i32_0 : i32, i32
  }
  func.func @transform_1(%arg0: i32) -> (i32, i32) {
    %c0_i32 = arith.constant 0 : i32
    %c0_i32_0 = arith.constant 0 : i32
    %c0_i32_1 = arith.constant 0 : i32
    return %c0_i32, %c0_i32_0 : i32, i32
  }
  func.func @transform_2(%arg0: i32) -> (i32, i32) {
    %c0_i32 = arith.constant 0 : i32
    %c0_i32_0 = arith.constant 0 : i32
    %c0_i32_1 = arith.constant 0 : i32
    return %c0_i32, %c0_i32_0 : i32, i32
  }
  func.func @transform_3(%arg0: i32) -> (i32, i32) {
    %c0_i32 = arith.constant 0 : i32
    %c0_i32_0 = arith.constant 0 : i32
    %c0_i32_1 = arith.constant 0 : i32
    return %c0_i32, %c0_i32_0 : i32, i32
  }
}

</mosaic_0001>

<llo_original>
// kernel: generalized_lehmer_layer.1
$region0: #{generalized_lehmer_layer.1}
  #allocation0 [shape = 'u32[]', space=smem, size = 0x4, offset = 0x4, fixed_abs, tag = 'smem constant byte address 0x4 - core index']
  #allocation1 [shape = 'u32[144,128]{1,0:T(1,128)}', space=vmem, size = 0x12000, scoped, tag = 'internal scratch']
  %s0 = inlined_call_operand.vmem [shape: bf16[8,128], index: 0, kind: input, shape index: {}]
  %s1 = inlined_call_operand.hbm [shape: bf16[128,128], index: 1, kind: input, shape index: {}]
  %s2 = inlined_call_operand.vmem [shape: f32[1,128], index: 2, kind: input, shape index: {}]
  %s3 = inlined_call_operand.hbm [shape: f32[8,128], index: 3, kind: output, shape index: {}]
  %s4 = sld [smem:[#allocation0]]
  $region26: #{generalized_lehmer_layer.1} parent=0
    _
  %s6 = ssub.s32 1, %s4
  %s7 = scalar_select 0, %s6, %s4
  $region1: #{generalized_lehmer_layer.1} parent=0
    #allocation2 [shape = 'u8[32768]{0}', space=vmem, size = 0x8000, scoped, tag = 'input window, operand 1, single buffered']
    #allocation3 [shape = 's32[1]{0}', space=sflag, size = 0x4, scoped, tag = 'scoped memory for generalized_lehmer_layer.1']
    #allocation4 [shape = 's32[1]{0}', space=sflag, size = 0x4, scoped, tag = 'scoped memory for generalized_lehmer_layer.1']
    #allocation5 [shape = 'u8[4096]{0}', space=vmem, size = 0x1000, scoped, tag = 'output window, operand 0, single buffered']
    %8 = vsyncpa [#allocation3], 0
    %9 = vsyncpa [#allocation4], 0
    // Predicated region
    $region2: #{generalized_lehmer_layer.1} parent=1 // pred_check
      _
    $region3: #{generalized_lehmer_layer.1} parent=1 // pred_check_branch
      %11 = sbr.rel (0) target = $region5
    $region4: #{generalized_lehmer_layer.1} parent=1 // pred_region
      _
    $region5: #{generalized_lehmer_layer.1} parent=1 // pred_fallthru
      _
    // Predicated region
    $region6: #{generalized_lehmer_layer.1} parent=1 // pred_check
      _
    $region7: #{generalized_lehmer_layer.1} parent=1 // pred_check_branch
      %13 = sbr.rel (0) target = $region9
    $region8: #{generalized_lehmer_layer.1} parent=1 // pred_region
      %s15 = ssub.s32 1024, 1024
      %16 = vsyncadd [#allocation3], %s15
      %s17 = sshll.u32 [#allocation2], 4
      %s18 = int_to_ptr.vmem [resolvable:$true] %s17
      %23 = dma.hbm_to_vmem [thread:$0]  %s1, 1024, %s18, [#allocation3], 64, 64, 4
    $region9: #{generalized_lehmer_layer.1} parent=1 // pred_fallthru
      _
    // Predicated region
    $region10: #{generalized_lehmer_layer.1} parent=1 // pred_check
      _
    $region11: #{generalized_lehmer_layer.1} parent=1 // pred_check_branch
      %25 = sbr.rel (0) target = $region13
    $region12: #{generalized_lehmer_layer.1} parent=1 // pred_region
      _
    $region13: #{generalized_lehmer_layer.1} parent=1 // pred_fallthru
      _
    // Predicated region
    $region14: #{generalized_lehmer_layer.1} parent=1 // pred_check
      _
    $region15: #{generalized_lehmer_layer.1} parent=1 // pred_check_branch
      %27 = sbr.rel (0) target = $region17
    $region16: #{generalized_lehmer_layer.1} parent=1 // pred_region
      %28 = dma.done [#allocation3], 1024
    $region17: #{generalized_lehmer_layer.1} parent=1 // pred_fallthru
      _
    %v30 = vld [vmem:[%s0] sm:$0xf]
    %v31 = vld [vmem:[#allocation2] sm:$0xf]
    %v32 = vld [vmem:[#allocation2 + $0x4] sm:$0xf]
    %v33 = vld [vmem:[#allocation2 + $0x8] sm:$0xf]
    %v34 = vld [vmem:[#allocation2 + $0xc] sm:$0xf]
    %v35 = vld [vmem:[#allocation2 + $0x10] sm:$0xf]
    %v36 = vld [vmem:[#allocation2 + $0x14] sm:$0xf]
    %v37 = vld [vmem:[#allocation2 + $0x18] sm:$0xf]
    %v38 = vld [vmem:[#allocation2 + $0x1c] sm:$0xf]
    %v39 = vld [vmem:[#allocation2 + $0x20] sm:$0xf]
    %v40 = vld [vmem:[#allocation2 + $0x24] sm:$0xf]
    %v41 = vld [vmem:[#allocation2 + $0x28] sm:$0xf]
    %v42 = vld [vmem:[#allocation2 + $0x2c] sm:$0xf]
    %v43 = vld [vmem:[#allocation2 + $0x30] sm:$0xf]
    %v44 = vld [vmem:[#allocation2 + $0x34] sm:$0xf]
    %v45 = vld [vmem:[#allocation2 + $0x38] sm:$0xf]
    %v46 = vld [vmem:[#allocation2 + $0x3c] sm:$0xf]
    %v47 = vld [vmem:[%s2] sm:$0x1]
    %v49 = vlaneseq
    %v50 = vshrl.u32 %v49, 7
    %v51 = vsub.s32 0, %v50
    %v52 = vrot.slane %v47, %v51
    %v70 = vunpack.c.l.b16 %v31
    %v71 = vunpack.c.l.b16 %v32
    %v72 = vunpack.c.l.b16 %v33
    %v73 = vunpack.c.l.b16 %v34
    %v74 = vunpack.c.l.b16 %v35
    %v75 = vunpack.c.l.b16 %v36
    %v76 = vunpack.c.l.b16 %v37
    %v77 = vunpack.c.l.b16 %v38
    %v78 = vunpack.c.l.b16 %v39
    %v79 = vunpack.c.l.b16 %v40
    %v80 = vunpack.c.l.b16 %v41
    %v81 = vunpack.c.l.b16 %v42
    %v82 = vunpack.c.l.b16 %v43
    %v83 = vunpack.c.l.b16 %v44
    %v84 = vunpack.c.l.b16 %v45
    %v85 = vunpack.c.l.b16 %v46
    %v86 = vpack.c.b16 %v71, %v70
    %v87 = vpack.c.b16 %v73, %v72
    %v88 = vpack.c.b16 %v75, %v74
    %v89 = vpack.c.b16 %v77, %v76
    %v90 = vpack.c.b16 %v79, %v78
    %v91 = vpack.c.b16 %v81, %v80
    %v92 = vpack.c.b16 %v83, %v82
    %v93 = vpack.c.b16 %v85, %v84
    %102 = vmatprep.subr.bf16.mxu0 0
    %103 = vmatpush1.bf16.msra.mxu0 %v86
    %104 = vmatprep.subr.bf16.mxu0 0
    %105 = vmatpush1.bf16.msra.mxu0 %v87
    %106 = vmatprep.subr.bf16.mxu0 0
    %107 = vmatpush1.bf16.msra.mxu0 %v88
    %108 = vmatprep.subr.bf16.mxu0 0
    %109 = vmatpush1.bf16.msra.mxu0 %v89
    %110 = vmatprep.subr.bf16.mxu0 0
    %111 = vmatpush1.bf16.msra.mxu0 %v90
    %112 = vmatprep.subr.bf16.mxu0 0
    %113 = vmatpush1.bf16.msra.mxu0 %v91
    %114 = vmatprep.subr.bf16.mxu0 0
    %115 = vmatpush1.bf16.msra.mxu0 %v92
    %116 = vmatprep.subr.bf16.mxu0 0
    %117 = vmatpush1.bf16.msra.mxu0 %v93
    %118 = vmatprep.subr.bf16.mxu0 0
    %119 = vmatpush1.bf16.msra.mxu0 0
    %120 = vmatprep.subr.bf16.mxu0 0
    %121 = vmatpush1.bf16.msra.mxu0 0
    %122 = vmatprep.subr.bf16.mxu0 0
    %123 = vmatpush1.bf16.msra.mxu0 0
    %124 = vmatprep.subr.bf16.mxu0 0
    %125 = vmatpush1.bf16.msra.mxu0 0
    %126 = vmatprep.subr.bf16.mxu0 0
    %127 = vmatpush1.bf16.msra.mxu0 0
    %128 = vmatprep.subr.bf16.mxu0 0
    %129 = vmatpush1.bf16.msra.mxu0 0
    %130 = vmatprep.subr.bf16.mxu0 0
    %131 = vmatpush1.bf16.msra.mxu0 0
    %132 = vmatprep.subr.bf16.mxu0 0
    %133 = vmatpush1.bf16.msra.mxu0 0
    %134 = vmatprep.mubr.bf16.mxu0 0
    %135 = vmatmul.mubr.bf16.gmra.mrb[0].mxu0 %v30
    %v136 = vpop.f32.mrb[0].mxu0
    %v137 = vadd.f32 %v52, %v136
    %v138 = vpop.f32.mrb[0].mxu0
    %v139 = vpop.f32.mrb[0].mxu0
    %v140 = vpop.f32.mrb[0].mxu0
    %141 = vdwg.mxu0
    %142 = vst [vmem:[#allocation5] sm:$0xff] %v137
    // Predicated region
    $region18: #{generalized_lehmer_layer.1} parent=1 // pred_check
      _
    $region19: #{generalized_lehmer_layer.1} parent=1 // pred_check_branch
      %144 = sbr.rel (0) target = $region21
    $region20: #{generalized_lehmer_layer.1} parent=1 // pred_region
      %s146 = ssub.s32 128, 128
      %147 = vsyncadd [#allocation4], %s146
      %s149 = sshll.u32 [#allocation5], 4
      %s150 = int_to_ptr.vmem [resolvable:$true] %s149
      %152 = dma.vmem_to_hbm [thread:$0]  %s150, 128, %s3, [#allocation4]
    $region21: #{generalized_lehmer_layer.1} parent=1 // pred_fallthru
      _
    // Predicated region
    $region22: #{generalized_lehmer_layer.1} parent=1 // pred_check
      _
    $region23: #{generalized_lehmer_layer.1} parent=1 // pred_check_branch
      %154 = sbr.rel (0) target = $region25
    $region24: #{generalized_lehmer_layer.1} parent=1 // pred_region
      %155 = dma.done [#allocation4], 128
    $region25: #{generalized_lehmer_layer.1} parent=1 // pred_fallthru
      _
    %156 = vsyncpa [#allocation3], 1
    %157 = vsyncpa [#allocation4], 1

</llo_original>
